<compile_context>
chip_gen: v5e
topology: v5e:2x2
jax: 0.10.0
libtpu: 0.0.40
codegen_flags: <defaults>
</compile_context>

<pallas_src>
import jax
import jax.numpy as jnp
from jax.experimental import pallas as pl
from jax.experimental.pallas import tpu as pltpu


def _downsample_kernel(w_ref, x_ref, r_ref, s_ref, o_ref):
    """One (batch, row-tile) grid step.

    w_ref: SMEM (Cout, Cin)        1x1-conv weights, 0.25 pool scale folded in
    x_ref: VMEM (1, Cin, 2*TH, W)  raw NCHW input rows (lane dim = W, dense)
    r_ref: VMEM (TH, 2*TH)         0/1 row-pair decimator
    s_ref: VMEM (W, Wh)            0/1 column-pair decimator
    o_ref: VMEM (1, Cout, TH, Wh)  raw NCHW output rows (lane dim = Wh, dense)
    """
    cin = x_ref.shape[1]
    cout = o_ref.shape[1]
    R = r_ref[...]
    S = s_ref[...]

    # 2x2 pooling (sum; the 1/4 lives in w) as two tiny decimation matmuls on
    # the idle MXU -- keeps the spatial axes in sublanes/lanes with no strided
    # slices or relayouts.  Channel loop is fully unrolled (cin is tiny).
    pooled = []
    for c in range(cin):
        plane = x_ref[0, c].astype(jnp.float32)                           # (2TH, W)
        vp = jnp.dot(R, plane, preferred_element_type=jnp.float32)        # (TH, W)
        pooled.append(jnp.dot(vp, S, preferred_element_type=jnp.float32)) # (TH, Wh)

    # 1x1 conv == per-pixel channel mix: unrolled VPU FMAs with scalar weights
    # read from SMEM (Cin/Cout are tiny -- an MXU matmul over a reduction dim
    # of 4 would be <2% utilized and would force channels into the lane dim).
    for o in range(cout):
        acc = pooled[0] * w_ref[o, 0]
        for c in range(1, cin):
            acc = acc + pooled[c] * w_ref[o, c]
        o_ref[0, o] = acc.astype(o_ref.dtype)


def _pick_row_tile(hh, cin, w, bytes_per_elem=4, target_block_bytes=1 << 20,
                   max_tile=256):
    """Largest output-row tile that keeps blocks 8-sublane aligned and bounds
    the per-step input block to ~1 MiB (double-buffer friendly on v7x's 64 MiB
    VMEM as well as v5e/v6e's 128 MiB)."""
    if hh % 8 != 0:
        return hh                     # single block: 2*TH == H (full dim) is legal
    best = 8
    t = 8
    while t <= min(hh, max_tile):
        if hh % t == 0 and cin * 2 * t * w * bytes_per_elem <= target_block_bytes:
            best = t
        t += 8
    return best


def downsample(x_nchw, w_oihw, *, row_tile=None):
    """DownSample forward.  x_nchw: (N, Cin, H, W); w_oihw: (Cout, Cin, 1, 1)."""
    N, Cin, H, W = x_nchw.shape
    Cout = w_oihw.shape[0]
    assert H % 2 == 0 and W % 2 == 0, (H, W)
    # TODO(synk): odd H/W needs true bilinear resampling weights (scale != 2).
    Hh, Wh = H // 2, W // 2

    TH = row_tile if row_tile is not None else _pick_row_tile(Hh, Cin, W)
    assert Hh % TH == 0 and (TH % 8 == 0 or TH == Hh), TH
    n_row_tiles = Hh // TH

    # 1x1-conv weight with the 2x2-average scale folded in (saves one vmul/elem).
    w2 = (w_oihw[:, :, 0, 0].astype(jnp.float32) * 0.25)                 # (Cout, Cin)

    # Exact 0/1 pair-sum decimation matrices (entries exact in any precision).
    R = (jnp.arange(2 * TH)[None, :] // 2
         == jnp.arange(TH)[:, None]).astype(jnp.float32)                 # (TH, 2TH)
    S = (jnp.arange(W)[:, None] // 2
         == jnp.arange(Wh)[None, :]).astype(jnp.float32)                 # (W, Wh)

    return pl.pallas_call(
        _downsample_kernel,
        out_shape=jax.ShapeDtypeStruct((N, Cout, Hh, Wh), x_nchw.dtype),
        grid_spec=pltpu.PrefetchScalarGridSpec(
            num_scalar_prefetch=0,
            grid=(N, n_row_tiles),
            in_specs=[
                pl.BlockSpec(memory_space=pltpu.MemorySpace.SMEM),            # w2
                pl.BlockSpec((1, Cin, 2 * TH, W), lambda n, r: (n, 0, r, 0)),  # x rows
                pl.BlockSpec((TH, 2 * TH), lambda n, r: (0, 0)),               # R (const)
                pl.BlockSpec((W, Wh), lambda n, r: (0, 0)),                    # S (const)
            ],
            out_specs=pl.BlockSpec((1, Cout, TH, Wh), lambda n, r: (n, 0, r, 0)),
        ),
        compiler_params=pltpu.CompilerParams(
            dimension_semantics=("parallel", "parallel"),
            vmem_limit_bytes=32 * 1024 * 1024,
        ),
    )(w2, x_nchw, R, S)


if __name__ == "__main__":
    # DownSample(in_channels=4, s_factor=4): 4 -> 8 channels, spatial /2
    in_channels, s_factor = 4, 4
    N, H, W = 2, 16, 16
    out_channels = in_channels + s_factor

    key = jax.random.PRNGKey(0)
    kx, kw = jax.random.split(key)
    x = jax.random.normal(kx, (N, in_channels, H, W), dtype=jnp.float32)
    # Conv2d(in, in+s, 1, bias=False) weight shape: (Cout, Cin, 1, 1)
    w = jax.random.normal(kw, (out_channels, in_channels, 1, 1),
                          dtype=jnp.float32) * 0.1

    y = jax.block_until_ready(downsample(x, w))

    # Pure-JAX reference of the same forward pass.
    ref_pool = x.reshape(N, in_channels, H // 2, 2, W // 2, 2).mean(axis=(3, 5))
    ref = jnp.einsum('nchw,oc->nohw', ref_pool, w[:, :, 0, 0])

    assert y.shape == (N, out_channels, H // 2, W // 2), y.shape
    err = float(jnp.max(jnp.abs(y - ref)))
    # f32 matmuls on the MXU use bf16-split passes; 1e-4 tolerance covers that
    # rounding while still being ~0.1% of the output magnitude.
    assert jnp.allclose(y, ref, atol=1e-4, rtol=1e-4), err
    print("KERNEL_OK")
</pallas_src>

<mosaic_0001>
module attributes {stable_mosaic.version = 11 : i64} {
  func.func @_downsample_kernel(%arg0: i32, %arg1: i32, %arg2: memref<8x4xf32, #tpu.memory_space<smem>>, %arg3: memref<1x4x16x16xf32, #tpu.memory_space<vmem>>, %arg4: memref<8x16xf32, #tpu.memory_space<vmem>>, %arg5: memref<16x8xf32, #tpu.memory_space<vmem>>, %arg6: memref<1x8x8x8xf32, #tpu.memory_space<vmem>>) attributes {dimension_semantics = [#tpu.dimension_semantics<parallel>, #tpu.dimension_semantics<parallel>], iteration_bounds = array<i64: 2, 1>, scalar_prefetch = 0 : i64, scratch_operands = 0 : i64, tpu.core_type = #tpu.core_type<tc>, window_params = [{transform_indices = @transform_0, window_bounds = array<i64: 8, 4>}, {transform_indices = @transform_1, window_bounds = array<i64: 1, 4, 16, 16>}, {pipeline_mode = #tpu.pipeline_mode<synchronous>, transform_indices = @transform_2, window_bounds = array<i64: 8, 16>}, {pipeline_mode = #tpu.pipeline_mode<synchronous>, transform_indices = @transform_3, window_bounds = array<i64: 16, 8>}, {transform_indices = @transform_4, window_bounds = array<i64: 1, 8, 8, 8>}]} {
    %c0 = arith.constant 0 : index
    %c0_0 = arith.constant 0 : index
    %0 = vector.load %arg4[%c0, %c0_0] : memref<8x16xf32, #tpu.memory_space<vmem>>, vector<8x16xf32>
    %c0_1 = arith.constant 0 : index
    %c0_2 = arith.constant 0 : index
    %1 = vector.load %arg5[%c0_1, %c0_2] : memref<16x8xf32, #tpu.memory_space<vmem>>, vector<16x8xf32>
    %c0_3 = arith.constant 0 : index
    %c0_4 = arith.constant 0 : index
    %c0_5 = arith.constant 0 : index
    %c0_6 = arith.constant 0 : index
    %2 = vector.load %arg3[%c0_3, %c0_4, %c0_5, %c0_6] : memref<1x4x16x16xf32, #tpu.memory_space<vmem>>, vector<1x1x16x16xf32>
    %3 = vector.shape_cast %2 : vector<1x1x16x16xf32> to vector<16x16xf32>
    %cst = arith.constant dense<0.000000e+00> : vector<8x16xf32>
    %4 = tpu.matmul %0, %3, %cst {dimension_numbers = #tpu.dot_dimension_numbers<[1], [0], [0], [1], [0, 0, 1, 1], [], []>} : vector<8x16xf32>, vector<16x16xf32>, vector<8x16xf32> -> vector<8x16xf32>
    %cst_7 = arith.constant dense<0.000000e+00> : vector<8x8xf32>
    %5 = tpu.matmul %4, %1, %cst_7 {dimension_numbers = #tpu.dot_dimension_numbers<[1], [0], [0], [1], [0, 0, 1, 1], [], []>} : vector<8x16xf32>, vector<16x8xf32>, vector<8x8xf32> -> vector<8x8xf32>
    %c0_8 = arith.constant 0 : index
    %c1 = arith.constant 1 : index
    %c0_9 = arith.constant 0 : index
    %c0_10 = arith.constant 0 : index
    %6 = vector.load %arg3[%c0_8, %c1, %c0_9, %c0_10] : memref<1x4x16x16xf32, #tpu.memory_space<vmem>>, vector<1x1x16x16xf32>
    %7 = vector.shape_cast %6 : vector<1x1x16x16xf32> to vector<16x16xf32>
    %cst_11 = arith.constant dense<0.000000e+00> : vector<8x16xf32>
    %8 = tpu.matmul %0, %7, %cst_11 {dimension_numbers = #tpu.dot_dimension_numbers<[1], [0], [0], [1], [0, 0, 1, 1], [], []>} : vector<8x16xf32>, vector<16x16xf32>, vector<8x16xf32> -> vector<8x16xf32>
    %cst_12 = arith.constant dense<0.000000e+00> : vector<8x8xf32>
    %9 = tpu.matmul %8, %1, %cst_12 {dimension_numbers = #tpu.dot_dimension_numbers<[1], [0], [0], [1], [0, 0, 1, 1], [], []>} : vector<8x16xf32>, vector<16x8xf32>, vector<8x8xf32> -> vector<8x8xf32>
    %c0_13 = arith.constant 0 : index
    %c2 = arith.constant 2 : index
    %c0_14 = arith.constant 0 : index
    %c0_15 = arith.constant 0 : index
    %10 = vector.load %arg3[%c0_13, %c2, %c0_14, %c0_15] : memref<1x4x16x16xf32, #tpu.memory_space<vmem>>, vector<1x1x16x16xf32>
    %11 = vector.shape_cast %10 : vector<1x1x16x16xf32> to vector<16x16xf32>
    %cst_16 = arith.constant dense<0.000000e+00> : vector<8x16xf32>
    %12 = tpu.matmul %0, %11, %cst_16 {dimension_numbers = #tpu.dot_dimension_numbers<[1], [0], [0], [1], [0, 0, 1, 1], [], []>} : vector<8x16xf32>, vector<16x16xf32>, vector<8x16xf32> -> vector<8x16xf32>
    %cst_17 = arith.constant dense<0.000000e+00> : vector<8x8xf32>
    %13 = tpu.matmul %12, %1, %cst_17 {dimension_numbers = #tpu.dot_dimension_numbers<[1], [0], [0], [1], [0, 0, 1, 1], [], []>} : vector<8x16xf32>, vector<16x8xf32>, vector<8x8xf32> -> vector<8x8xf32>
    %c0_18 = arith.constant 0 : index
    %c3 = arith.constant 3 : index
    %c0_19 = arith.constant 0 : index
    %c0_20 = arith.constant 0 : index
    %14 = vector.load %arg3[%c0_18, %c3, %c0_19, %c0_20] : memref<1x4x16x16xf32, #tpu.memory_space<vmem>>, vector<1x1x16x16xf32>
    %15 = vector.shape_cast %14 : vector<1x1x16x16xf32> to vector<16x16xf32>
    %cst_21 = arith.constant dense<0.000000e+00> : vector<8x16xf32>
    %16 = tpu.matmul %0, %15, %cst_21 {dimension_numbers = #tpu.dot_dimension_numbers<[1], [0], [0], [1], [0, 0, 1, 1], [], []>} : vector<8x16xf32>, vector<16x16xf32>, vector<8x16xf32> -> vector<8x16xf32>
    %cst_22 = arith.constant dense<0.000000e+00> : vector<8x8xf32>
    %17 = tpu.matmul %16, %1, %cst_22 {dimension_numbers = #tpu.dot_dimension_numbers<[1], [0], [0], [1], [0, 0, 1, 1], [], []>} : vector<8x16xf32>, vector<16x8xf32>, vector<8x8xf32> -> vector<8x8xf32>
    %c0_23 = arith.constant 0 : index
    %c0_24 = arith.constant 0 : index
    %18 = memref.load %arg2[%c0_23, %c0_24] : memref<8x4xf32, #tpu.memory_space<smem>>
    %19 = vector.broadcast %18 : f32 to vector<8x8xf32>
    %20 = arith.mulf %5, %19 : vector<8x8xf32>
    %c0_25 = arith.constant 0 : index
    %c1_26 = arith.constant 1 : index
    %21 = memref.load %arg2[%c0_25, %c1_26] : memref<8x4xf32, #tpu.memory_space<smem>>
    %22 = vector.broadcast %21 : f32 to vector<8x8xf32>
    %23 = arith.mulf %9, %22 : vector<8x8xf32>
    %24 = arith.addf %20, %23 : vector<8x8xf32>
    %c0_27 = arith.constant 0 : index
    %c2_28 = arith.constant 2 : index
    %25 = memref.load %arg2[%c0_27, %c2_28] : memref<8x4xf32, #tpu.memory_space<smem>>
    %26 = vector.broadcast %25 : f32 to vector<8x8xf32>
    %27 = arith.mulf %13, %26 : vector<8x8xf32>
    %28 = arith.addf %24, %27 : vector<8x8xf32>
    %c0_29 = arith.constant 0 : index
    %c3_30 = arith.constant 3 : index
    %29 = memref.load %arg2[%c0_29, %c3_30] : memref<8x4xf32, #tpu.memory_space<smem>>
    %30 = vector.broadcast %29 : f32 to vector<8x8xf32>
    %31 = arith.mulf %17, %30 : vector<8x8xf32>
    %32 = arith.addf %28, %31 : vector<8x8xf32>
    %c0_31 = arith.constant 0 : index
    %c0_32 = arith.constant 0 : index
    %c0_33 = arith.constant 0 : index
    %c0_34 = arith.constant 0 : index
    %33 = vector.load %arg6[%c0_31, %c0_32, %c0_33, %c0_34] : memref<1x8x8x8xf32, #tpu.memory_space<vmem>>, vector<1x1x8x8xf32>
    %34 = vector.shape_cast %33 : vector<1x1x8x8xf32> to vector<8x8xf32>
    %35 = vector.shape_cast %32 : vector<8x8xf32> to vector<1x1x8x8xf32>
    tpu.vector_store %arg6[%c0_31, %c0_32, %c0_33, %c0_34], %35 {strides = array<i32>} : memref<1x8x8x8xf32, #tpu.memory_space<vmem>>, vector<1x1x8x8xf32>,
    %c1_35 = arith.constant 1 : index
    %c0_36 = arith.constant 0 : index
    %36 = memref.load %arg2[%c1_35, %c0_36] : memref<8x4xf32, #tpu.memory_space<smem>>
    %37 = vector.broadcast %36 : f32 to vector<8x8xf32>
    %38 = arith.mulf %5, %37 : vector<8x8xf32>
    %c1_37 = arith.constant 1 : index
    %c1_38 = arith.constant 1 : index
    %39 = memref.load %arg2[%c1_37, %c1_38] : memref<8x4xf32, #tpu.memory_space<smem>>
    %40 = vector.broadcast %39 : f32 to vector<8x8xf32>
    %41 = arith.mulf %9, %40 : vector<8x8xf32>
    %42 = arith.addf %38, %41 : vector<8x8xf32>
    %c1_39 = arith.constant 1 : index
    %c2_40 = arith.constant 2 : index
    %43 = memref.load %arg2[%c1_39, %c2_40] : memref<8x4xf32, #tpu.memory_space<smem>>
    %44 = vector.broadcast %43 : f32 to vector<8x8xf32>
    %45 = arith.mulf %13, %44 : vector<8x8xf32>
    %46 = arith.addf %42, %45 : vector<8x8xf32>
    %c1_41 = arith.constant 1 : index
    %c3_42 = arith.constant 3 : index
    %47 = memref.load %arg2[%c1_41, %c3_42] : memref<8x4xf32, #tpu.memory_space<smem>>
    %48 = vector.broadcast %47 : f32 to vector<8x8xf32>
    %49 = arith.mulf %17, %48 : vector<8x8xf32>
    %50 = arith.addf %46, %49 : vector<8x8xf32>
    %c0_43 = arith.constant 0 : index
    %c1_44 = arith.constant 1 : index
    %c0_45 = arith.constant 0 : index
    %c0_46 = arith.constant 0 : index
    %51 = vector.load %arg6[%c0_43, %c1_44, %c0_45, %c0_46] : memref<1x8x8x8xf32, #tpu.memory_space<vmem>>, vector<1x1x8x8xf32>
    %52 = vector.shape_cast %51 : vector<1x1x8x8xf32> to vector<8x8xf32>
    %53 = vector.shape_cast %50 : vector<8x8xf32> to vector<1x1x8x8xf32>
    tpu.vector_store %arg6[%c0_43, %c1_44, %c0_45, %c0_46], %53 {strides = array<i32>} : memref<1x8x8x8xf32, #tpu.memory_space<vmem>>, vector<1x1x8x8xf32>,
    %c2_47 = arith.constant 2 : index
    %c0_48 = arith.constant 0 : index
    %54 = memref.load %arg2[%c2_47, %c0_48] : memref<8x4xf32, #tpu.memory_space<smem>>
    %55 = vector.broadcast %54 : f32 to vector<8x8xf32>
    %56 = arith.mulf %5, %55 : vector<8x8xf32>
    %c2_49 = arith.constant 2 : index
    %c1_50 = arith.constant 1 : index
    %57 = memref.load %arg2[%c2_49, %c1_50] : memref<8x4xf32, #tpu.memory_space<smem>>
    %58 = vector.broadcast %57 : f32 to vector<8x8xf32>
    %59 = arith.mulf %9, %58 : vector<8x8xf32>
    %60 = arith.addf %56, %59 : vector<8x8xf32>
    %c2_51 = arith.constant 2 : index
    %c2_52 = arith.constant 2 : index
    %61 = memref.load %arg2[%c2_51, %c2_52] : memref<8x4xf32, #tpu.memory_space<smem>>
    %62 = vector.broadcast %61 : f32 to vector<8x8xf32>
    %63 = arith.mulf %13, %62 : vector<8x8xf32>
    %64 = arith.addf %60, %63 : vector<8x8xf32>
    %c2_53 = arith.constant 2 : index
    %c3_54 = arith.constant 3 : index
    %65 = memref.load %arg2[%c2_53, %c3_54] : memref<8x4xf32, #tpu.memory_space<smem>>
    %66 = vector.broadcast %65 : f32 to vector<8x8xf32>
    %67 = arith.mulf %17, %66 : vector<8x8xf32>
    %68 = arith.addf %64, %67 : vector<8x8xf32>
    %c0_55 = arith.constant 0 : index
    %c2_56 = arith.constant 2 : index
    %c0_57 = arith.constant 0 : index
    %c0_58 = arith.constant 0 : index
    %69 = vector.load %arg6[%c0_55, %c2_56, %c0_57, %c0_58] : memref<1x8x8x8xf32, #tpu.memory_space<vmem>>, vector<1x1x8x8xf32>
    %70 = vector.shape_cast %69 : vector<1x1x8x8xf32> to vector<8x8xf32>
    %71 = vector.shape_cast %68 : vector<8x8xf32> to vector<1x1x8x8xf32>
    tpu.vector_store %arg6[%c0_55, %c2_56, %c0_57, %c0_58], %71 {strides = array<i32>} : memref<1x8x8x8xf32, #tpu.memory_space<vmem>>, vector<1x1x8x8xf32>,
    %c3_59 = arith.constant 3 : index
    %c0_60 = arith.constant 0 : index
    %72 = memref.load %arg2[%c3_59, %c0_60] : memref<8x4xf32, #tpu.memory_space<smem>>
    %73 = vector.broadcast %72 : f32 to vector<8x8xf32>
    %74 = arith.mulf %5, %73 : vector<8x8xf32>
    %c3_61 = arith.constant 3 : index
    %c1_62 = arith.constant 1 : index
    %75 = memref.load %arg2[%c3_61, %c1_62] : memref<8x4xf32, #tpu.memory_space<smem>>
    %76 = vector.broadcast %75 : f32 to vector<8x8xf32>
    %77 = arith.mulf %9, %76 : vector<8x8xf32>
    %78 = arith.addf %74, %77 : vector<8x8xf32>
    %c3_63 = arith.constant 3 : index
    %c2_64 = arith.constant 2 : index
    %79 = memref.load %arg2[%c3_63, %c2_64] : memref<8x4xf32, #tpu.memory_space<smem>>
    %80 = vector.broadcast %79 : f32 to vector<8x8xf32>
    %81 = arith.mulf %13, %80 : vector<8x8xf32>
    %82 = arith.addf %78, %81 : vector<8x8xf32>
    %c3_65 = arith.constant 3 : index
    %c3_66 = arith.constant 3 : index
    %83 = memref.load %arg2[%c3_65, %c3_66] : memref<8x4xf32, #tpu.memory_space<smem>>
    %84 = vector.broadcast %83 : f32 to vector<8x8xf32>
    %85 = arith.mulf %17, %84 : vector<8x8xf32>
    %86 = arith.addf %82, %85 : vector<8x8xf32>
    %c0_67 = arith.constant 0 : index
    %c3_68 = arith.constant 3 : index
    %c0_69 = arith.constant 0 : index
    %c0_70 = arith.constant 0 : index
    %87 = vector.load %arg6[%c0_67, %c3_68, %c0_69, %c0_70] : memref<1x8x8x8xf32, #tpu.memory_space<vmem>>, vector<1x1x8x8xf32>
    %88 = vector.shape_cast %87 : vector<1x1x8x8xf32> to vector<8x8xf32>
    %89 = vector.shape_cast %86 : vector<8x8xf32> to vector<1x1x8x8xf32>
    tpu.vector_store %arg6[%c0_67, %c3_68, %c0_69, %c0_70], %89 {strides = array<i32>} : memref<1x8x8x8xf32, #tpu.memory_space<vmem>>, vector<1x1x8x8xf32>,
    %c4 = arith.constant 4 : index
    %c0_71 = arith.constant 0 : index
    %90 = memref.load %arg2[%c4, %c0_71] : memref<8x4xf32, #tpu.memory_space<smem>>
    %91 = vector.broadcast %90 : f32 to vector<8x8xf32>
    %92 = arith.mulf %5, %91 : vector<8x8xf32>
    %c4_72 = arith.constant 4 : index
    %c1_73 = arith.constant 1 : index
    %93 = memref.load %arg2[%c4_72, %c1_73] : memref<8x4xf32, #tpu.memory_space<smem>>
    %94 = vector.broadcast %93 : f32 to vector<8x8xf32>
    %95 = arith.mulf %9, %94 : vector<8x8xf32>
    %96 = arith.addf %92, %95 : vector<8x8xf32>
    %c4_74 = arith.constant 4 : index
    %c2_75 = arith.constant 2 : index
    %97 = memref.load %arg2[%c4_74, %c2_75] : memref<8x4xf32, #tpu.memory_space<smem>>
    %98 = vector.broadcast %97 : f32 to vector<8x8xf32>
    %99 = arith.mulf %13, %98 : vector<8x8xf32>
    %100 = arith.addf %96, %99 : vector<8x8xf32>
    %c4_76 = arith.constant 4 : index
    %c3_77 = arith.constant 3 : index
    %101 = memref.load %arg2[%c4_76, %c3_77] : memref<8x4xf32, #tpu.memory_space<smem>>
    %102 = vector.broadcast %101 : f32 to vector<8x8xf32>
    %103 = arith.mulf %17, %102 : vector<8x8xf32>
    %104 = arith.addf %100, %103 : vector<8x8xf32>
    %c0_78 = arith.constant 0 : index
    %c4_79 = arith.constant 4 : index
    %c0_80 = arith.constant 0 : index
    %c0_81 = arith.constant 0 : index
    %105 = vector.load %arg6[%c0_78, %c4_79, %c0_80, %c0_81] : memref<1x8x8x8xf32, #tpu.memory_space<vmem>>, vector<1x1x8x8xf32>
    %106 = vector.shape_cast %105 : vector<1x1x8x8xf32> to vector<8x8xf32>
    %107 = vector.shape_cast %104 : vector<8x8xf32> to vector<1x1x8x8xf32>
    tpu.vector_store %arg6[%c0_78, %c4_79, %c0_80, %c0_81], %107 {strides = array<i32>} : memref<1x8x8x8xf32, #tpu.memory_space<vmem>>, vector<1x1x8x8xf32>,
    %c5 = arith.constant 5 : index
    %c0_82 = arith.constant 0 : index
    %108 = memref.load %arg2[%c5, %c0_82] : memref<8x4xf32, #tpu.memory_space<smem>>
    %109 = vector.broadcast %108 : f32 to vector<8x8xf32>
    %110 = arith.mulf %5, %109 : vector<8x8xf32>
    %c5_83 = arith.constant 5 : index
    %c1_84 = arith.constant 1 : index
    %111 = memref.load %arg2[%c5_83, %c1_84] : memref<8x4xf32, #tpu.memory_space<smem>>
    %112 = vector.broadcast %111 : f32 to vector<8x8xf32>
    %113 = arith.mulf %9, %112 : vector<8x8xf32>
    %114 = arith.addf %110, %113 : vector<8x8xf32>
    %c5_85 = arith.constant 5 : index
    %c2_86 = arith.constant 2 : index
    %115 = memref.load %arg2[%c5_85, %c2_86] : memref<8x4xf32, #tpu.memory_space<smem>>
    %116 = vector.broadcast %115 : f32 to vector<8x8xf32>
    %117 = arith.mulf %13, %116 : vector<8x8xf32>
    %118 = arith.addf %114, %117 : vector<8x8xf32>
    %c5_87 = arith.constant 5 : index
    %c3_88 = arith.constant 3 : index
    %119 = memref.load %arg2[%c5_87, %c3_88] : memref<8x4xf32, #tpu.memory_space<smem>>
    %120 = vector.broadcast %119 : f32 to vector<8x8xf32>
    %121 = arith.mulf %17, %120 : vector<8x8xf32>
    %122 = arith.addf %118, %121 : vector<8x8xf32>
    %c0_89 = arith.constant 0 : index
    %c5_90 = arith.constant 5 : index
    %c0_91 = arith.constant 0 : index
    %c0_92 = arith.constant 0 : index
    %123 = vector.load %arg6[%c0_89, %c5_90, %c0_91, %c0_92] : memref<1x8x8x8xf32, #tpu.memory_space<vmem>>, vector<1x1x8x8xf32>
    %124 = vector.shape_cast %123 : vector<1x1x8x8xf32> to vector<8x8xf32>
    %125 = vector.shape_cast %122 : vector<8x8xf32> to vector<1x1x8x8xf32>
    tpu.vector_store %arg6[%c0_89, %c5_90, %c0_91, %c0_92], %125 {strides = array<i32>} : memref<1x8x8x8xf32, #tpu.memory_space<vmem>>, vector<1x1x8x8xf32>,
    %c6 = arith.constant 6 : index
    %c0_93 = arith.constant 0 : index
    %126 = memref.load %arg2[%c6, %c0_93] : memref<8x4xf32, #tpu.memory_space<smem>>
    %127 = vector.broadcast %126 : f32 to vector<8x8xf32>
    %128 = arith.mulf %5, %127 : vector<8x8xf32>
    %c6_94 = arith.constant 6 : index
    %c1_95 = arith.constant 1 : index
    %129 = memref.load %arg2[%c6_94, %c1_95] : memref<8x4xf32, #tpu.memory_space<smem>>
    %130 = vector.broadcast %129 : f32 to vector<8x8xf32>
    %131 = arith.mulf %9, %130 : vector<8x8xf32>
    %132 = arith.addf %128, %131 : vector<8x8xf32>
    %c6_96 = arith.constant 6 : index
    %c2_97 = arith.constant 2 : index
    %133 = memref.load %arg2[%c6_96, %c2_97] : memref<8x4xf32, #tpu.memory_space<smem>>
    %134 = vector.broadcast %133 : f32 to vector<8x8xf32>
    %135 = arith.mulf %13, %134 : vector<8x8xf32>
    %136 = arith.addf %132, %135 : vector<8x8xf32>
    %c6_98 = arith.constant 6 : index
    %c3_99 = arith.constant 3 : index
    %137 = memref.load %arg2[%c6_98, %c3_99] : memref<8x4xf32, #tpu.memory_space<smem>>
    %138 = vector.broadcast %137 : f32 to vector<8x8xf32>
    %139 = arith.mulf %17, %138 : vector<8x8xf32>
    %140 = arith.addf %136, %139 : vector<8x8xf32>
    %c0_100 = arith.constant 0 : index
    %c6_101 = arith.constant 6 : index
    %c0_102 = arith.constant 0 : index
    %c0_103 = arith.constant 0 : index
    %141 = vector.load %arg6[%c0_100, %c6_101, %c0_102, %c0_103] : memref<1x8x8x8xf32, #tpu.memory_space<vmem>>, vector<1x1x8x8xf32>
    %142 = vector.shape_cast %141 : vector<1x1x8x8xf32> to vector<8x8xf32>
    %143 = vector.shape_cast %140 : vector<8x8xf32> to vector<1x1x8x8xf32>
    tpu.vector_store %arg6[%c0_100, %c6_101, %c0_102, %c0_103], %143 {strides = array<i32>} : memref<1x8x8x8xf32, #tpu.memory_space<vmem>>, vector<1x1x8x8xf32>,
    %c7 = arith.constant 7 : index
    %c0_104 = arith.constant 0 : index
    %144 = memref.load %arg2[%c7, %c0_104] : memref<8x4xf32, #tpu.memory_space<smem>>
    %145 = vector.broadcast %144 : f32 to vector<8x8xf32>
    %146 = arith.mulf %5, %145 : vector<8x8xf32>
    %c7_105 = arith.constant 7 : index
    %c1_106 = arith.constant 1 : index
    %147 = memref.load %arg2[%c7_105, %c1_106] : memref<8x4xf32, #tpu.memory_space<smem>>
    %148 = vector.broadcast %147 : f32 to vector<8x8xf32>
    %149 = arith.mulf %9, %148 : vector<8x8xf32>
    %150 = arith.addf %146, %149 : vector<8x8xf32>
    %c7_107 = arith.constant 7 : index
    %c2_108 = arith.constant 2 : index
    %151 = memref.load %arg2[%c7_107, %c2_108] : memref<8x4xf32, #tpu.memory_space<smem>>
    %152 = vector.broadcast %151 : f32 to vector<8x8xf32>
    %153 = arith.mulf %13, %152 : vector<8x8xf32>
    %154 = arith.addf %150, %153 : vector<8x8xf32>
    %c7_109 = arith.constant 7 : index
    %c3_110 = arith.constant 3 : index
    %155 = memref.load %arg2[%c7_109, %c3_110] : memref<8x4xf32, #tpu.memory_space<smem>>
    %156 = vector.broadcast %155 : f32 to vector<8x8xf32>
    %157 = arith.mulf %17, %156 : vector<8x8xf32>
    %158 = arith.addf %154, %157 : vector<8x8xf32>
    %c0_111 = arith.constant 0 : index
    %c7_112 = arith.constant 7 : index
    %c0_113 = arith.constant 0 : index
    %c0_114 = arith.constant 0 : index
    %159 = vector.load %arg6[%c0_111, %c7_112, %c0_113, %c0_114] : memref<1x8x8x8xf32, #tpu.memory_space<vmem>>, vector<1x1x8x8xf32>
    %160 = vector.shape_cast %159 : vector<1x1x8x8xf32> to vector<8x8xf32>
    %161 = vector.shape_cast %158 : vector<8x8xf32> to vector<1x1x8x8xf32>
    tpu.vector_store %arg6[%c0_111, %c7_112, %c0_113, %c0_114], %161 {strides = array<i32>} : memref<1x8x8x8xf32, #tpu.memory_space<vmem>>, vector<1x1x8x8xf32>,
    return
  }
  func.func @transform_0(%arg0: i32, %arg1: i32) -> (i32, i32) {
    %c0_i32 = arith.constant 0 : i32
    %c0_i32_0 = arith.constant 0 : i32
    %c0_i32_1 = arith.constant 0 : i32
    return %c0_i32, %c0_i32_0 : i32, i32
  }
  func.func @transform_1(%arg0: i32, %arg1: i32) -> (i32, i32, i32, i32) {
    %c0_i32 = arith.constant 0 : i32
    %c0_i32_0 = arith.constant 0 : i32
    %c0_i32_1 = arith.constant 0 : i32
    return %arg0, %c0_i32, %arg1, %c0_i32_0 : i32, i32, i32, i32
  }
  func.func @transform_2(%arg0: i32, %arg1: i32) -> (i32, i32) {
    %c0_i32 = arith.constant 0 : i32
    %c0_i32_0 = arith.constant 0 : i32
    %c0_i32_1 = arith.constant 0 : i32
    return %c0_i32, %c0_i32_0 : i32, i32
  }
  func.func @transform_3(%arg0: i32, %arg1: i32) -> (i32, i32) {
    %c0_i32 = arith.constant 0 : i32
    %c0_i32_0 = arith.constant 0 : i32
    %c0_i32_1 = arith.constant 0 : i32
    return %c0_i32, %c0_i32_0 : i32, i32
  }
  func.func @transform_4(%arg0: i32, %arg1: i32) -> (i32, i32, i32, i32) {
    %c0_i32 = arith.constant 0 : i32
    %c0_i32_0 = arith.constant 0 : i32
    %c0_i32_1 = arith.constant 0 : i32
    return %arg0, %c0_i32, %arg1, %c0_i32_0 : i32, i32, i32, i32
  }
}

</mosaic_0001>

<llo_original>
// kernel: tpu_custom_call.1
$region0: #{tpu_custom_call.1}
  #allocation0 [shape = 'u32[]', space=smem, size = 0x4, offset = 0x4, fixed_abs, tag = 'smem constant byte address 0x4 - core index']
  #allocation1 [shape = 'u32[72,128]{1,0:T(1,128)}', space=vmem, size = 0x9000, scoped, tag = 'internal scratch']
  %s0 = inlined_call_operand.vmem [shape: f32[8,4], index: 0, kind: input, shape index: {}]
  %s1 = inlined_call_operand.hbm [shape: f32[2,4,16,16], index: 1, kind: input, shape index: {}]
  %s2 = inlined_call_operand.vmem [shape: f32[8,16], index: 2, kind: input, shape index: {}]
  %s3 = inlined_call_operand.vmem [shape: f32[16,8], index: 3, kind: input, shape index: {}]
  %s4 = inlined_call_operand.hbm [shape: f32[2,8,8,8], index: 4, kind: output, shape index: {}]
  %s5 = sld [smem:[#allocation0]]
  $region57: #{tpu_custom_call.1} parent=0
    _
  %s7 = ssub.s32 1, %s5
  %s8 = scalar_select 0, %s7, %s5
  $region1: #{tpu_custom_call.1} parent=0
    #allocation2 [shape = 'u8[4096]{0}', space=smem, size = 0x1000, scoped, tag = 'input window, operand 0, single buffered']
    #allocation3 [shape = 's32[2]{0}', space=sflag, size = 0x8, scoped, tag = 'scoped memory for tpu_custom_call.1']
    #allocation4 [shape = 's32[2]{0}', space=sflag, size = 0x8, scoped, tag = 'scoped memory for tpu_custom_call.1']
    #allocation5 [shape = 's32[2]{0}', space=sflag, size = 0x8, scoped, tag = 'scoped memory for tpu_custom_call.1']
    #allocation6 [shape = 'u8[65536]{0}', space=vmem, size = 0x10000, scoped, tag = 'input window, operand 1']
    #allocation7 [shape = 'u8[65536]{0}', space=vmem, size = 0x10000, scoped, tag = 'output window, operand 0']
    %9 = vsyncpa [#allocation5], 0
    %10 = vsyncpa [#allocation3], 0
    %s11 = scalar_lea.sflag [#allocation3], 1
    %12 = vsyncpa %s11, 0
    %13 = vsyncpa [#allocation4], 0
    %s14 = scalar_lea.sflag [#allocation4], 1
    %15 = vsyncpa %s14, 0
    loop: start=0, step=1, limit=4
    $region2: #{tpu_custom_call.1} parent=1 // loop_pre_header
      _
    $region3: #{tpu_custom_call.1} parent=1 // loop_header
      %s17 = sphi 0, %s21
      %p18 = scmp.ge.s32.totalorder %s17, 4
      %s24 = sphi 0, %s36
      %s25 = sphi 0, %s32
      %s26 = sphi 0, %s24
      %s27 = sphi 0, %s25
      %s28 = sphi 0, %s26
      %s29 = sphi 0, %s27
      %s37 = sphi 0, %s37
      %s39 = sphi 0, %s37
      %s40 = sphi 0, %s39
      %s54 = sphi 0, %s40
      %s62 = sphi 0, %s64
      %s65 = sphi 0, %s62
      %s66 = sphi 0, %s65
      %s82 = sphi 0, %s66
      %s86 = sphi 0, %s86
      %s88 = sphi 0, %s86
      %s89 = sphi 0, %s88
      %s103 = sphi 0, %s89
      %s107 = sphi 0, %s107
      %s109 = sphi 0, %s107
      %s110 = sphi 0, %s109
      %s124 = sphi 0, %s110
      %s132 = sphi 0, %s134
      %s135 = sphi 0, %s132
      %s136 = sphi 0, %s135
      %s152 = sphi 0, %s136
    $region4: #{tpu_custom_call.1} parent=1 // loop_header_branch
      %20 = sbr.rel (%p18) target = $region8
    $region5: #{tpu_custom_call.1} parent=1 // loop_body
      %s22 = ssub.s32 %s17, 1
      %s23 = ssub.s32 %s17, 2
      %s30 = sadd.s32 1, %s25
      %p31 = scmp.ge.s32.totalorder %s30, 1
      %s32 = scalar_select %p31, 0, %s30
      %s33 = sadd.s32 1, %s24
      %s34 = scalar_select %p31, %s33, %s24
      %p35 = scmp.ge.s32.totalorder %s34, 2
      %s36 = scalar_select %p35, 0, %s34
      %s38 = sadd.s32 %s37, 1
      %p41 = scmp.eq.s32.totalorder %s17, 1
      %p42 = scmp.ne.s32.totalorder %s37, %s39
      %p43 = scmp.eq.s32.totalorder %s17, 0
      %p44 = por %p42, %p43
      %p45 = scmp.ne.s32.totalorder %s37, %s39
      %p46 = scmp.eq.s32.totalorder %s22, 1
      %p47 = por %p45, %p46
      %p48 = scmp.ne.s32.totalorder %s39, %s40
      %p49 = scmp.eq.s32.totalorder %s22, 0
      %p50 = por %p48, %p49
      %p51 = scmp.ne.s32.totalorder %s39, %s40
      %p52 = scmp.eq.s32.totalorder %s23, 1
      %p53 = por %p51, %p52
      %p55 = scmp.ne.s32.totalorder %s40, %s54
      %p56 = scmp.eq.s32.totalorder %s23, 0
      %p57 = por %p55, %p56
      %s58 = ssub.s32 %s24, %s36
      %s59 = ssub.s32 %s25, %s32
      %s60 = sor.u32 %s58, %s59
      %p61 = scmp.eq.s32.totalorder %s60, 0
      %s63 = sadd.s32 %s62, 1
      %s64 = scalar_select %p61, %s62, %s63
      %p67 = pneg %p61
      %p68 = scmp.eq.s32.totalorder %s17, 1
      %p69 = por %p67, %p68
      %p70 = scmp.ne.s32.totalorder %s62, %s65
      %p71 = scmp.eq.s32.totalorder %s17, 0
      %p72 = por %p70, %p71
      %p73 = scmp.ne.s32.totalorder %s62, %s65
      %p74 = scmp.eq.s32.totalorder %s22, 1
      %p75 = por %p73, %p74
      %p76 = scmp.ne.s32.totalorder %s65, %s66
      %p77 = scmp.eq.s32.totalorder %s22, 0
      %p78 = por %p76, %p77
      %p79 = scmp.ne.s32.totalorder %s65, %s66
      %p80 = scmp.eq.s32.totalorder %s23, 1
      %p81 = por %p79, %p80
      %p83 = scmp.ne.s32.totalorder %s66, %s82
      %p84 = scmp.eq.s32.totalorder %s23, 0
      %p85 = por %p83, %p84
      %s87 = sadd.s32 %s86, 1
      %p90 = scmp.eq.s32.totalorder %s17, 1
      %p91 = scmp.ne.s32.totalorder %s86, %s88
      %p92 = scmp.eq.s32.totalorder %s17, 0
      %p93 = por %p91, %p92
      %p94 = scmp.ne.s32.totalorder %s86, %s88
      %p95 = scmp.eq.s32.totalorder %s22, 1
      %p96 = por %p94, %p95
      %p97 = scmp.ne.s32.totalorder %s88, %s89
      %p98 = scmp.eq.s32.totalorder %s22, 0
      %p99 = por %p97, %p98
      %p100 = scmp.ne.s32.totalorder %s88, %s89
      %p101 = scmp.eq.s32.totalorder %s23, 1
      %p102 = por %p100, %p101
      %p104 = scmp.ne.s32.totalorder %s89, %s103
      %p105 = scmp.eq.s32.totalorder %s23, 0
      %p106 = por %p104, %p105
      %s108 = sadd.s32 %s107, 1
      %p111 = scmp.eq.s32.totalorder %s17, 1
      %p112 = scmp.ne.s32.totalorder %s107, %s109
      %p113 = scmp.eq.s32.totalorder %s17, 0
      %p114 = por %p112, %p113
      %p115 = scmp.ne.s32.totalorder %s107, %s109
      %p116 = scmp.eq.s32.totalorder %s22, 1
      %p117 = por %p115, %p116
      %p118 = scmp.ne.s32.totalorder %s109, %s110
      %p119 = scmp.eq.s32.totalorder %s22, 0
      %p120 = por %p118, %p119
      %p121 = scmp.ne.s32.totalorder %s109, %s110
      %p122 = scmp.eq.s32.totalorder %s23, 1
      %p123 = por %p121, %p122
      %p125 = scmp.ne.s32.totalorder %s110, %s124
      %p126 = scmp.eq.s32.totalorder %s23, 0
      %p127 = por %p125, %p126
      %s128 = ssub.s32 %s24, %s36
      %s129 = ssub.s32 %s25, %s32
      %s130 = sor.u32 %s128, %s129
      %p131 = scmp.eq.s32.totalorder %s130, 0
      %s133 = sadd.s32 %s132, 1
      %s134 = scalar_select %p131, %s132, %s133
      %p137 = pneg %p131
      %p138 = scmp.eq.s32.totalorder %s17, 1
      %p139 = por %p137, %p138
      %p140 = scmp.ne.s32.totalorder %s132, %s135
      %p141 = scmp.eq.s32.totalorder %s17, 0
      %p142 = por %p140, %p141
      %p143 = scmp.ne.s32.totalorder %s132, %s135
      %p144 = scmp.eq.s32.totalorder %s22, 1
      %p145 = por %p143, %p144
      %p146 = scmp.ne.s32.totalorder %s135, %s136
      %p147 = scmp.eq.s32.totalorder %s22, 0
      %p148 = por %p146, %p147
      %p149 = scmp.ne.s32.totalorder %s135, %s136
      %p150 = scmp.eq.s32.totalorder %s23, 1
      %p151 = por %p149, %p150
      %p153 = scmp.ne.s32.totalorder %s136, %s152
      %p154 = scmp.eq.s32.totalorder %s23, 0
      %p155 = por %p153, %p154
      %p156 = scmp.le.s32.totalorder 1, %s17
      %p157 = scmp.lt.s32.totalorder %s17, 3
      %p158 = pnand %p156, %p157
      %p159 = pneg %p158
      // Predicated region
      $region9: #{tpu_custom_call.1} parent=5 // pred_check
        _
      $region10: #{tpu_custom_call.1} parent=5 // pred_check_branch
        %161 = sbr.rel (%p158) target = $region12
      $region11: #{tpu_custom_call.1} parent=5 // pred_region
        %s162 = ssub.s32 %s17, 1
        // Predicated region
        $region13: #{tpu_custom_call.1} parent=11 // pred_check
          %p163 = pneg %p50
        $region14: #{tpu_custom_call.1} parent=11 // pred_check_branch
          %165 = sbr.rel (%p163) target = $region16
        $region15: #{tpu_custom_call.1} parent=11 // pred_region
          %167 = vsyncadd [#allocation5], 0
          %s169 = sshll.u32 %s0, 4
          %s170 = int_to_ptr.vmem [resolvable:$true] %s169
          %172 = dma.vmem_to_smem %s170, 128, [#allocation2], [#allocation5]
        $region16: #{tpu_custom_call.1} parent=11 // pred_fallthru
          _
        // Predicated region
        $region17: #{tpu_custom_call.1} parent=11 // pred_check
          %p173 = pneg %p99
        $region18: #{tpu_custom_call.1} parent=11 // pred_check_branch
          %175 = sbr.rel (%p173) target = $region20
        $region19: #{tpu_custom_call.1} parent=11 // pred_region
          _
        $region20: #{tpu_custom_call.1} parent=11 // pred_fallthru
          _
        // Predicated region
        $region21: #{tpu_custom_call.1} parent=11 // pred_check
          %p176 = pneg %p120
        $region22: #{tpu_custom_call.1} parent=11 // pred_check_branch
          %178 = sbr.rel (%p176) target = $region24
        $region23: #{tpu_custom_call.1} parent=11 // pred_region
          _
        $region24: #{tpu_custom_call.1} parent=11 // pred_fallthru
          _
      $region12: #{tpu_custom_call.1} parent=5 // pred_fallthru
        _
      %p179 = scmp.lt.s32.totalorder %s17, 2
      // Predicated region
      $region25: #{tpu_custom_call.1} parent=5 // pred_check
        %p180 = pneg %p179
      $region26: #{tpu_custom_call.1} parent=5 // pred_check_branch
        %182 = sbr.rel (%p180) target = $region28
      $region27: #{tpu_custom_call.1} parent=5 // pred_region
        // Predicated region
        $region29: #{tpu_custom_call.1} parent=27 // pred_check
          %p183 = pneg %p72
        $region30: #{tpu_custom_call.1} parent=27 // pred_check_branch
          %185 = sbr.rel (%p183) target = $region32
        $region31: #{tpu_custom_call.1} parent=27 // pred_region
          %s186 = sand.u32 %s62, 1
          %s187 = scalar_lea.sflag [#allocation3], %s186
          %s188 = sand.u32 %s62, 1
          %s189 = smul.addr %s188, 64
          %s190 = scalar_lea.vmem [#allocation6], %s189
          %s191 = smul.u32 2, %s25
          %193 = vsyncadd %s187, 0
          %s194 = smul.addr %s24, 8
          %s195 = sadd.s32 %s191, %s194
          %s196 = smul.addr %s195, 8
          %s197 = scalar_lea.hbm %s1, %s196
          %s198 = sshll.u32 %s197, 4
          %s199 = int_to_ptr.hbm [resolvable:$true] %s198
          %s200 = sshll.u32 %s190, 4
          %s201 = int_to_ptr.vmem [resolvable:$true] %s200
          %206 = dma.hbm_to_vmem [thread:$0]  %s199, 1024, %s201, %s187, 128, 128, 8
        $region32: #{tpu_custom_call.1} parent=27 // pred_fallthru
          _
      $region28: #{tpu_custom_call.1} parent=5 // pred_fallthru
        _
      %p207 = scmp.le.s32.totalorder 1, %s17
      %p208 = scmp.lt.s32.totalorder %s17, 3
      %p209 = pnand %p207, %p208
      %p210 = pneg %p209
      // Predicated region
      $region33: #{tpu_custom_call.1} parent=5 // pred_check
        _
      $region34: #{tpu_custom_call.1} parent=5 // pred_check_branch
        %212 = sbr.rel (%p209) target = $region36
      $region35: #{tpu_custom_call.1} parent=5 // pred_region
        %s213 = ssub.s32 %s17, 1
        // Predicated region
        $region37: #{tpu_custom_call.1} parent=35 // pred_check
          %p214 = pneg %p50
        $region38: #{tpu_custom_call.1} parent=35 // pred_check_branch
          %216 = sbr.rel (%p214) target = $region40
        $region39: #{tpu_custom_call.1} parent=35 // pred_region
          %218 = dma.done [#allocation5], 128
        $region40: #{tpu_custom_call.1} parent=35 // pred_fallthru
          _
        %s219 = sand.u32 %s65, 1
        %s220 = scalar_lea.sflag [#allocation3], %s219
        %s221 = sand.u32 %s65, 1
        %s222 = smul.addr %s221, 64
        %s223 = scalar_lea.vmem [#allocation6], %s222
        // Predicated region
        $region41: #{tpu_custom_call.1} parent=35 // pred_check
          %p224 = pneg %p78
        $region42: #{tpu_custom_call.1} parent=35 // pred_check_branch
          %226 = sbr.rel (%p224) target = $region44
        $region43: #{tpu_custom_call.1} parent=35 // pred_region
          %228 = dma.done %s220, 1024
        $region44: #{tpu_custom_call.1} parent=35 // pred_fallthru
          _
        %229 = sfence
        %p230 = pneg %p50
        %p231 = pneg %p47
        %s232 = sand.u32 %s65, 1
        %s233 = scalar_lea.sflag [#allocation3], %s232
        %s234 = sand.u32 %s65, 1
        %s235 = smul.addr %s234, 64
        %s236 = scalar_lea.vmem [#allocation6], %s235
        %p237 = pneg %p78
        %p238 = pneg %p75
        %p239 = pneg %p99
        %p240 = pneg %p96
        %p241 = pneg %p120
        %p242 = pneg %p117
        %p243 = pneg %p148
        %p244 = pneg %p145
        %s245 = sand.u32 %s135, 1
        %s246 = scalar_lea.sflag [#allocation4], %s245
        %s247 = sand.u32 %s135, 1
        %s248 = smul.addr %s247, 64
        %s249 = scalar_lea.vmem [#allocation7], %s248
        %s250 = smul.u32 2, %s27
        %v251 = vld [vmem:[%s2] sm:$0xff]
        %v252 = vld [vmem:[%s3] sm:$0xff]
        %v253 = vld [vmem:[%s3 + $0x8] sm:$0xff]
        %v254 = vld [vmem:[%s223] sm:$0xff]
        %v255 = vld [vmem:[%s223 + $0x8] sm:$0xff]
        %vm256 = vcmask 130048
        %v258 = vsel %vm256, %v251, 0
        %260 = vmatpush.msra.mxu0 0.0
        %261 = vmatpush.msra.mxu0 0.0
        %262 = vmatpush.msra.mxu0 0.0
        %263 = vmatpush.msra.mxu0 0.0
        %264 = vmatpush.msra.mxu0 0.0
        %265 = vmatpush.msra.mxu0 0.0
        %266 = vmatpush.msra.mxu0 0.0
        %267 = vmatpush.msra.mxu0 0.0
        %268 = vmatpush.msra.mxu0 0.0
        %269 = vmatpush.msra.mxu0 0.0
        %270 = vmatpush.msra.mxu0 0.0
        %271 = vmatpush.msra.mxu0 0.0
        %272 = vmatpush.msra.mxu0 0.0
        %273 = vmatpush.msra.mxu0 0.0
        %274 = vmatpush.msra.mxu0 %v255
        %275 = vmatpush.msra.mxu0 %v254
        %276 = vmatmul.f32.gmra.mxu0 %v258
        %v277 = vpop.f32.mrf.mxu0
        %v278 = vadd.f32 0.0, %v277
        %279 = vdwg.mxu0
        %v281 = vsel %vm256, %v278, 0
        %283 = vmatpush.msra.mxu0 0.0
        %284 = vmatpush.msra.mxu0 0.0
        %285 = vmatpush.msra.mxu0 0.0
        %286 = vmatpush.msra.mxu0 0.0
        %287 = vmatpush.msra.mxu0 0.0
        %288 = vmatpush.msra.mxu0 0.0
        %289 = vmatpush.msra.mxu0 0.0
        %290 = vmatpush.msra.mxu0 0.0
        %291 = vmatpush.msra.mxu0 0.0
        %292 = vmatpush.msra.mxu0 0.0
        %293 = vmatpush.msra.mxu0 0.0
        %294 = vmatpush.msra.mxu0 0.0
        %295 = vmatpush.msra.mxu0 0.0
        %296 = vmatpush.msra.mxu0 0.0
        %297 = vmatpush.msra.mxu0 %v253
        %298 = vmatpush.msra.mxu0 %v252
        %299 = vmatmul.f32.gmra.mxu0 %v281
        %v300 = vpop.f32.mrf.mxu0
        %v301 = vadd.f32 0.0, %v300
        %302 = vdwg.mxu0
        %s303 = scalar_lea.vmem %s223, 16 [#allocation6]
        %v304 = vld [vmem:[%s303] sm:$0xff]
        %v305 = vld [vmem:[%s303 + $0x8] sm:$0xff]
        %306 = vmatpush.msra.mxu0 0.0
        %307 = vmatpush.msra.mxu0 0.0
        %308 = vmatpush.msra.mxu0 0.0
        %309 = vmatpush.msra.mxu0 0.0
        %310 = vmatpush.msra.mxu0 0.0
        %311 = vmatpush.msra.mxu0 0.0
        %312 = vmatpush.msra.mxu0 0.0
        %313 = vmatpush.msra.mxu0 0.0
        %314 = vmatpush.msra.mxu0 0.0
        %315 = vmatpush.msra.mxu0 0.0
        %316 = vmatpush.msra.mxu0 0.0
        %317 = vmatpush.msra.mxu0 0.0
        %318 = vmatpush.msra.mxu0 0.0
        %319 = vmatpush.msra.mxu0 0.0
        %320 = vmatpush.msra.mxu0 %v305
        %321 = vmatpush.msra.mxu0 %v304
        %322 = vmatmul.f32.gmra.mxu0 %v258
        %v323 = vpop.f32.mrf.mxu0
        %v324 = vadd.f32 0.0, %v323
        %325 = vdwg.mxu0
        %v327 = vsel %vm256, %v324, 0
        %329 = vmatpush.msra.mxu0 0.0
        %330 = vmatpush.msra.mxu0 0.0
        %331 = vmatpush.msra.mxu0 0.0
        %332 = vmatpush.msra.mxu0 0.0
        %333 = vmatpush.msra.mxu0 0.0
        %334 = vmatpush.msra.mxu0 0.0
        %335 = vmatpush.msra.mxu0 0.0
        %336 = vmatpush.msra.mxu0 0.0
        %337 = vmatpush.msra.mxu0 0.0
        %338 = vmatpush.msra.mxu0 0.0
        %339 = vmatpush.msra.mxu0 0.0
        %340 = vmatpush.msra.mxu0 0.0
        %341 = vmatpush.msra.mxu0 0.0
        %342 = vmatpush.msra.mxu0 0.0
        %343 = vmatpush.msra.mxu0 %v253
        %344 = vmatpush.msra.mxu0 %v252
        %345 = vmatmul.f32.gmra.mxu0 %v327
        %v346 = vpop.f32.mrf.mxu0
        %v347 = vadd.f32 0.0, %v346
        %348 = vdwg.mxu0
        %s349 = scalar_lea.vmem %s223, 32 [#allocation6]
        %v350 = vld [vmem:[%s349] sm:$0xff]
        %v351 = vld [vmem:[%s349 + $0x8] sm:$0xff]
        %352 = vmatpush.msra.mxu0 0.0
        %353 = vmatpush.msra.mxu0 0.0
        %354 = vmatpush.msra.mxu0 0.0
        %355 = vmatpush.msra.mxu0 0.0
        %356 = vmatpush.msra.mxu0 0.0
        %357 = vmatpush.msra.mxu0 0.0
        %358 = vmatpush.msra.mxu0 0.0
        %359 = vmatpush.msra.mxu0 0.0
        %360 = vmatpush.msra.mxu0 0.0
        %361 = vmatpush.msra.mxu0 0.0
        %362 = vmatpush.msra.mxu0 0.0
        %363 = vmatpush.msra.mxu0 0.0
        %364 = vmatpush.msra.mxu0 0.0
        %365 = vmatpush.msra.mxu0 0.0
        %366 = vmatpush.msra.mxu0 %v351
        %367 = vmatpush.msra.mxu0 %v350
        %368 = vmatmul.f32.gmra.mxu0 %v258
        %v369 = vpop.f32.mrf.mxu0
        %v370 = vadd.f32 0.0, %v369
        %371 = vdwg.mxu0
        %v373 = vsel %vm256, %v370, 0
        %375 = vmatpush.msra.mxu0 0.0
        %376 = vmatpush.msra.mxu0 0.0
        %377 = vmatpush.msra.mxu0 0.0
        %378 = vmatpush.msra.mxu0 0.0
        %379 = vmatpush.msra.mxu0 0.0
        %380 = vmatpush.msra.mxu0 0.0
        %381 = vmatpush.msra.mxu0 0.0
        %382 = vmatpush.msra.mxu0 0.0
        %383 = vmatpush.msra.mxu0 0.0
        %384 = vmatpush.msra.mxu0 0.0
        %385 = vmatpush.msra.mxu0 0.0
        %386 = vmatpush.msra.mxu0 0.0
        %387 = vmatpush.msra.mxu0 0.0
        %388 = vmatpush.msra.mxu0 0.0
        %389 = vmatpush.msra.mxu0 %v253
        %390 = vmatpush.msra.mxu0 %v252
        %391 = vmatmul.f32.gmra.mxu0 %v373
        %v392 = vpop.f32.mrf.mxu0
        %v393 = vadd.f32 0.0, %v392
        %394 = vdwg.mxu0
        %s395 = scalar_lea.vmem %s223, 48 [#allocation6]
        %v396 = vld [vmem:[%s395] sm:$0xff]
        %v397 = vld [vmem:[%s395 + $0x8] sm:$0xff]
        %398 = vmatpush.msra.mxu0 0.0
        %399 = vmatpush.msra.mxu0 0.0
        %400 = vmatpush.msra.mxu0 0.0
        %401 = vmatpush.msra.mxu0 0.0
        %402 = vmatpush.msra.mxu0 0.0
        %403 = vmatpush.msra.mxu0 0.0
        %404 = vmatpush.msra.mxu0 0.0
        %405 = vmatpush.msra.mxu0 0.0
        %406 = vmatpush.msra.mxu0 0.0
        %407 = vmatpush.msra.mxu0 0.0
        %408 = vmatpush.msra.mxu0 0.0
        %409 = vmatpush.msra.mxu0 0.0
        %410 = vmatpush.msra.mxu0 0.0
        %411 = vmatpush.msra.mxu0 0.0
        %412 = vmatpush.msra.mxu0 %v397
        %413 = vmatpush.msra.mxu0 %v396
        %414 = vmatmul.f32.gmra.mxu0 %v258
        %v415 = vpop.f32.mrf.mxu0
        %v416 = vadd.f32 0.0, %v415
        %417 = vdwg.mxu0
        %v419 = vsel %vm256, %v416, 0
        %421 = vmatpush.msra.mxu0 0.0
        %422 = vmatpush.msra.mxu0 0.0
        %423 = vmatpush.msra.mxu0 0.0
        %424 = vmatpush.msra.mxu0 0.0
        %425 = vmatpush.msra.mxu0 0.0
        %426 = vmatpush.msra.mxu0 0.0
        %427 = vmatpush.msra.mxu0 0.0
        %428 = vmatpush.msra.mxu0 0.0
        %429 = vmatpush.msra.mxu0 0.0
        %430 = vmatpush.msra.mxu0 0.0
        %431 = vmatpush.msra.mxu0 0.0
        %432 = vmatpush.msra.mxu0 0.0
        %433 = vmatpush.msra.mxu0 0.0
        %434 = vmatpush.msra.mxu0 0.0
        %435 = vmatpush.msra.mxu0 %v253
        %436 = vmatpush.msra.mxu0 %v252
        %437 = vmatmul.f32.gmra.mxu0 %v419
        %v438 = vpop.f32.mrf.mxu0
        %v439 = vadd.f32 0.0, %v438
        %440 = vdwg.mxu0
        %s441 = sld [smem:[#allocation2]]
        %v442 = vstv %s441
        %v443 = vmul.f32 %v301, %v442
        %s444 = sld [smem:[#allocation2 + $0x1]]
        %v445 = vstv %s444
        %v446 = vmul.f32 %v347, %v445
        %v447 = vadd.f32 %v443, %v446
        %s448 = sld [smem:[#allocation2 + $0x2]]
        %v449 = vstv %s448
        %v450 = vmul.f32 %v393, %v449
        %v451 = vadd.f32 %v447, %v450
        %s452 = sld [smem:[#allocation2 + $0x3]]
        %v453 = vstv %s452
        %v454 = vmul.f32 %v439, %v453
        %v455 = vadd.f32 %v451, %v454
        %vm456 = vcmask 64512
        %457 = vst.msk [vmem:[%s249] sm:$0xff] %vm456, %v455
        %s458 = sld [smem:[#allocation2 + $0x80]]
        %v459 = vstv %s458
        %v460 = vmul.f32 %v301, %v459
        %s461 = sld [smem:[#allocation2 + $0x81]]
        %v462 = vstv %s461
        %v463 = vmul.f32 %v347, %v462
        %v464 = vadd.f32 %v460, %v463
        %s465 = sld [smem:[#allocation2 + $0x82]]
        %v466 = vstv %s465
        %v467 = vmul.f32 %v393, %v466
        %v468 = vadd.f32 %v464, %v467
        %s469 = sld [smem:[#allocation2 + $0x83]]
        %v470 = vstv %s469
        %v471 = vmul.f32 %v439, %v470
        %v472 = vadd.f32 %v468, %v471
        %s473 = scalar_lea.vmem %s249, 8 [#allocation7]
        %474 = vst.msk [vmem:[%s473] sm:$0xff] %vm456, %v472
        %s475 = sld [smem:[#allocation2 + $0x100]]
        %v476 = vstv %s475
        %v477 = vmul.f32 %v301, %v476
        %s478 = sld [smem:[#allocation2 + $0x101]]
        %v479 = vstv %s478
        %v480 = vmul.f32 %v347, %v479
        %v481 = vadd.f32 %v477, %v480
        %s482 = sld [smem:[#allocation2 + $0x102]]
        %v483 = vstv %s482
        %v484 = vmul.f32 %v393, %v483
        %v485 = vadd.f32 %v481, %v484
        %s486 = sld [smem:[#allocation2 + $0x103]]
        %v487 = vstv %s486
        %v488 = vmul.f32 %v439, %v487
        %v489 = vadd.f32 %v485, %v488
        %s490 = scalar_lea.vmem %s249, 16 [#allocation7]
        %491 = vst.msk [vmem:[%s490] sm:$0xff] %vm456, %v489
        %s492 = sld [smem:[#allocation2 + $0x180]]
        %v493 = vstv %s492
        %v494 = vmul.f32 %v301, %v493
        %s495 = sld [smem:[#allocation2 + $0x181]]
        %v496 = vstv %s495
        %v497 = vmul.f32 %v347, %v496
        %v498 = vadd.f32 %v494, %v497
        %s499 = sld [smem:[#allocation2 + $0x182]]
        %v500 = vstv %s499
        %v501 = vmul.f32 %v393, %v500
        %v502 = vadd.f32 %v498, %v501
        %s503 = sld [smem:[#allocation2 + $0x183]]
        %v504 = vstv %s503
        %v505 = vmul.f32 %v439, %v504
        %v506 = vadd.f32 %v502, %v505
        %s507 = scalar_lea.vmem %s249, 24 [#allocation7]
        %508 = vst.msk [vmem:[%s507] sm:$0xff] %vm456, %v506
        %s509 = sld [smem:[#allocation2 + $0x200]]
        %v510 = vstv %s509
        %v511 = vmul.f32 %v301, %v510
        %s512 = sld [smem:[#allocation2 + $0x201]]
        %v513 = vstv %s512
        %v514 = vmul.f32 %v347, %v513
        %v515 = vadd.f32 %v511, %v514
        %s516 = sld [smem:[#allocation2 + $0x202]]
        %v517 = vstv %s516
        %v518 = vmul.f32 %v393, %v517
        %v519 = vadd.f32 %v515, %v518
        %s520 = sld [smem:[#allocation2 + $0x203]]
        %v521 = vstv %s520
        %v522 = vmul.f32 %v439, %v521
        %v523 = vadd.f32 %v519, %v522
        %s524 = scalar_lea.vmem %s249, 32 [#allocation7]
        %525 = vst.msk [vmem:[%s524] sm:$0xff] %vm456, %v523
        %s526 = sld [smem:[#allocation2 + $0x280]]
        %v527 = vstv %s526
        %v528 = vmul.f32 %v301, %v527
        %s529 = sld [smem:[#allocation2 + $0x281]]
        %v530 = vstv %s529
        %v531 = vmul.f32 %v347, %v530
        %v532 = vadd.f32 %v528, %v531
        %s533 = sld [smem:[#allocation2 + $0x282]]
        %v534 = vstv %s533
        %v535 = vmul.f32 %v393, %v534
        %v536 = vadd.f32 %v532, %v535
        %s537 = sld [smem:[#allocation2 + $0x283]]
        %v538 = vstv %s537
        %v539 = vmul.f32 %v439, %v538
        %v540 = vadd.f32 %v536, %v539
        %s541 = scalar_lea.vmem %s249, 40 [#allocation7]
        %542 = vst.msk [vmem:[%s541] sm:$0xff] %vm456, %v540
        %s543 = sld [smem:[#allocation2 + $0x300]]
        %v544 = vstv %s543
        %v545 = vmul.f32 %v301, %v544
        %s546 = sld [smem:[#allocation2 + $0x301]]
        %v547 = vstv %s546
        %v548 = vmul.f32 %v347, %v547
        %v549 = vadd.f32 %v545, %v548
        %s550 = sld [smem:[#allocation2 + $0x302]]
        %v551 = vstv %s550
        %v552 = vmul.f32 %v393, %v551
        %v553 = vadd.f32 %v549, %v552
        %s554 = sld [smem:[#allocation2 + $0x303]]
        %v555 = vstv %s554
        %v556 = vmul.f32 %v439, %v555
        %v557 = vadd.f32 %v553, %v556
        %s558 = scalar_lea.vmem %s249, 48 [#allocation7]
        %559 = vst.msk [vmem:[%s558] sm:$0xff] %vm456, %v557
        %s560 = sld [smem:[#allocation2 + $0x380]]
        %v561 = vstv %s560
        %v562 = vmul.f32 %v301, %v561
        %s563 = sld [smem:[#allocation2 + $0x381]]
        %v564 = vstv %s563
        %v565 = vmul.f32 %v347, %v564
        %v566 = vadd.f32 %v562, %v565
        %s567 = sld [smem:[#allocation2 + $0x382]]
        %v568 = vstv %s567
        %v569 = vmul.f32 %v393, %v568
        %v570 = vadd.f32 %v566, %v569
        %s571 = sld [smem:[#allocation2 + $0x383]]
        %v572 = vstv %s571
        %v573 = vmul.f32 %v439, %v572
        %v574 = vadd.f32 %v570, %v573
        %s575 = scalar_lea.vmem %s249, 56 [#allocation7]
        %576 = vst.msk [vmem:[%s575] sm:$0xff] %vm456, %v574
        %s577 = sand.u32 %s135, 1
        %s578 = scalar_lea.sflag [#allocation4], %s577
        %s579 = sand.u32 %s135, 1
        %s580 = smul.addr %s579, 64
        %s581 = scalar_lea.vmem [#allocation7], %s580
        // Predicated region
        $region45: #{tpu_custom_call.1} parent=35 // pred_check
          %p582 = pneg %p145
        $region46: #{tpu_custom_call.1} parent=35 // pred_check_branch
          %584 = sbr.rel (%p582) target = $region48
        $region47: #{tpu_custom_call.1} parent=35 // pred_region
          %586 = vsyncadd %s578, 0
          %s587 = smul.addr %s26, 8
          %s588 = sadd.s32 %s27, %s587
          %s589 = smul.addr %s588, 8
          %s590 = scalar_lea.hbm %s4, %s589
          %s591 = sshll.u32 %s581, 4
          %s592 = int_to_ptr.vmem [resolvable:$true] %s591
          %s593 = sshll.u32 %s590, 4
          %s594 = int_to_ptr.hbm [resolvable:$true] %s593
          %599 = dma.vmem_to_hbm [thread:$0]  %s592, 1024, %s594, %s578, 128, 128, 8
        $region48: #{tpu_custom_call.1} parent=35 // pred_fallthru
          _
      $region36: #{tpu_custom_call.1} parent=5 // pred_fallthru
        _
      %p600 = scmp.le.s32.totalorder 2, %s17
      // Predicated region
      $region49: #{tpu_custom_call.1} parent=5 // pred_check
        %p601 = pneg %p600
      $region50: #{tpu_custom_call.1} parent=5 // pred_check_branch
        %603 = sbr.rel (%p601) target = $region52
      $region51: #{tpu_custom_call.1} parent=5 // pred_region
        %s604 = ssub.s32 %s17, 2
        // Predicated region
        $region53: #{tpu_custom_call.1} parent=51 // pred_check
          %p605 = pneg %p151
        $region54: #{tpu_custom_call.1} parent=51 // pred_check_branch
          %607 = sbr.rel (%p605) target = $region56
        $region55: #{tpu_custom_call.1} parent=51 // pred_region
          %s608 = sand.u32 %s136, 1
          %s609 = scalar_lea.sflag [#allocation4], %s608
          %s610 = sand.u32 %s136, 1
          %s611 = smul.addr %s610, 64
          %s612 = scalar_lea.vmem [#allocation7], %s611
          %614 = dma.done %s609, 1024
        $region56: #{tpu_custom_call.1} parent=51 // pred_fallthru
          _
      $region52: #{tpu_custom_call.1} parent=5 // pred_fallthru
        _
    $region6: #{tpu_custom_call.1} parent=1 // loop_footer
      %s21 = sadd.s32 1, %s17
    $region7: #{tpu_custom_call.1} parent=1 // loop_footer_branch
      %16 = sbr.rel target = $region3
    $region8: #{tpu_custom_call.1} parent=1 // loop_exit
      _
    %615 = vsyncpa [#allocation3], 1
    %s616 = scalar_lea.sflag [#allocation3], 1
    %617 = vsyncpa %s616, 1
    %618 = vsyncpa [#allocation4], 1
    %s619 = scalar_lea.sflag [#allocation4], 1
    %620 = vsyncpa %s619, 1
    %621 = vsyncpa [#allocation5], 1
    %s622 = scalar_lea.sflag [#allocation5], 1
    %623 = vsyncpa %s622, 1

</llo_original>
